<compile_context>
chip_gen: v7x
topology: tpu7x:2x2x1
jax: 0.10.0
libtpu: 0.0.40
codegen_flags: <defaults>
</compile_context>

<pallas_src>
import jax
import jax.numpy as jnp
import numpy as np
from jax.experimental import pallas as pl
from jax.experimental.pallas import tpu as pltpu


# ----------------------------------------------------------------------------- kernel
def _leontief_step_kernel(a_ref, at_ref, z_ref, bias_ref, o_ref):
    """One priceLeontief step on a lane-dense state.

    a_ref    : (B, n, n)  A
    at_ref   : (B, n, n)  A^T          (hoisted: transposed once in the wrapper)
    z_ref    : (B, 2n)    z = [x ; p]  (lane-dense, last dim 2n instead of 1)
    bias_ref : (B, n)     A^T @ deltaE (hoisted: z-invariant, computed once)
    o_ref    : (B, 2n)    f(z, A)
    """
    n = a_ref.shape[-1]
    A = a_ref[...]
    At = at_ref[...]
    z = z_ref[...]
    x = z[:, :n]                       # (B, n)
    p = z[:, n:]                       # (B, n)

    # dCurve(p) = 1.42 / (exp(10 * (p / 0.4 - 1)) + 1)      (EUP exp, VPU arithmetic)
    d_curve = 1.42 / (jnp.exp(10.0 * (p / 0.4 - 1.0)) + 1.0)

    # Tiny batched matvecs: keep on the VPU (mul + lane reduction), do NOT use the MXU.
    top = jnp.sum(A * x[:, None, :], axis=-1) + d_curve            # A @ x + dCurve(p)
    bot = jnp.sum(At * p[:, None, :], axis=-1) + bias_ref[...]     # A^T @ p + A^T @ deltaE

    o_ref[:, :n] = top
    o_ref[:, n:] = bot


def leontief_step(A, A_T, z_flat, at_deltaE):
    """Pallas call for one f(z, A) evaluation.  Whole problem in one block / grid point."""
    B, n, _ = A.shape
    D = 2 * n
    return pl.pallas_call(
        _leontief_step_kernel,
        out_shape=jax.ShapeDtypeStruct((B, D), z_flat.dtype),
        grid_spec=pltpu.PrefetchScalarGridSpec(
            num_scalar_prefetch=0,
            grid=(1,),                                   # single step: no per-batch micro-blocks
            in_specs=[
                pl.BlockSpec((B, n, n), lambda i: (0, 0, 0)),
                pl.BlockSpec((B, n, n), lambda i: (0, 0, 0)),
                pl.BlockSpec((B, D), lambda i: (0, 0)),
                pl.BlockSpec((B, n), lambda i: (0, 0)),
            ],
            out_specs=pl.BlockSpec((B, D), lambda i: (0, 0)),
        ),
        compiler_params=pltpu.CompilerParams(
            dimension_semantics=("arbitrary",)),
    )(A, A_T, z_flat, at_deltaE)


# --------------------------------------------------------------------- pure-JAX reference
def leontief_step_ref(A, z_flat, at_deltaE):
    n = A.shape[-1]
    x = z_flat[:, :n]
    p = z_flat[:, n:]
    d_curve = 1.42 / (jnp.exp(10.0 * (p / 0.4 - 1.0)) + 1.0)
    top = jnp.einsum("bij,bj->bi", A, x) + d_curve
    bot = jnp.einsum("bji,bj->bi", A, p) + at_deltaE
    return jnp.concatenate([top, bot], axis=-1)


# --------------------------------------------------------------------------- anderson
def anderson(f, x0, m=5, lam=1e-4, max_iter=100, tol=1e-4, beta=1.0):
    """Anderson acceleration (JAX port of the torch solver), on flattened (B, D) states."""
    B, D = x0.shape
    dtype = x0.dtype
    X = jnp.zeros((B, m, D), dtype)
    F = jnp.zeros((B, m, D), dtype)
    f0 = f(x0)
    X = X.at[:, 0].set(x0)
    F = F.at[:, 0].set(f0)
    f1 = f(f0)
    X = X.at[:, 1].set(f0)
    F = F.at[:, 1].set(f1)

    y = jnp.zeros((B, m + 1, 1), dtype).at[:, 0, 0].set(1.0)
    I_m = jnp.eye(m, dtype=dtype)
    I_m1 = jnp.eye(m + 1, dtype=dtype)

    def body(carry):
        k, X, F, zk, res = carry
        n_act = jnp.minimum(k, m)
        G = F - X                                              # unfilled rows are zero
        H = jnp.zeros((B, m + 1, m + 1), dtype)
        H = H.at[:, 1:, 1:].set(jnp.einsum("bid,bjd->bij", G, G) + lam * I_m)
        H = H.at[:, 0, 1:].set(1.0).at[:, 1:, 0].set(1.0)
        # Emulate the torch [:n+1, :n+1] slice with a fixed-shape masked system.
        idx = jnp.arange(m + 1)
        active = idx <= n_act
        mask = active[:, None] & active[None, :]
        H = jnp.where(mask[None], H, I_m1[None])
        alpha = jnp.linalg.solve(H, y)[:, 1:, 0]               # (B, m); zero on inactive rows
        alpha = alpha * active[1:][None, :].astype(dtype)
        xk = beta * jnp.einsum("bm,bmd->bd", alpha, F) \
            + (1.0 - beta) * jnp.einsum("bm,bmd->bd", alpha, X)
        fk = f(xk)
        slot = k % m
        X = X.at[:, slot].set(xk)
        F = F.at[:, slot].set(fk)
        res = jnp.linalg.norm(fk - xk) / (1e-5 + jnp.linalg.norm(fk))
        return (k + 1, X, F, xk, res)

    def cond(carry):
        k, _, _, _, res = carry
        return (k < max_iter) & (res >= tol)

    init = (jnp.array(2, jnp.int32), X, F, x0, jnp.array(jnp.inf, dtype))
    _, _, _, z_last, res = jax.lax.while_loop(cond, body, init)
    return z_last, res


# -------------------------------------------------------------------- DEQ forward pass
def deq_fixed_point_forward(A, deltaE, *, m=5, lam=1e-4, tol=1e-4, max_iter=100, beta=1.0):
    """DEQFixedPoint.forward(A) for priceLeontief (interSec=[]), returning z of shape (B, 2n, 1)."""
    B, n, _ = A.shape
    # Hoisted, solver-invariant quantities (computed once, not per f evaluation).
    A_T = jnp.swapaxes(A, 1, 2)
    at_deltaE = jnp.einsum("bji,bj->bi", A, jnp.broadcast_to(deltaE[..., 0], (B, n)))

    f = lambda z_flat: leontief_step(A, A_T, z_flat, at_deltaE)

    z0 = jnp.zeros((B, 2 * n), A.dtype)                        # torch: cat(zeros, zeros)
    z_star, _ = anderson(f, z0, m=m, lam=lam, max_iter=max_iter, tol=tol, beta=beta)
    z = f(z_star)                                              # final application, as in torch
    return z[..., None]                                        # back to (B, 2n, 1)


# --------------------------------------------------------------------------------- main
if __name__ == "__main__":
    batch, n_sectors = 2, 8
    key = jax.random.PRNGKey(0)
    k_a, k_d, k_z = jax.random.split(key, 3)

    # Leontief-style A: non-negative, row sums < 1 (spectral radius < 1 -> fixed point exists).
    A = 0.08 * jax.random.uniform(k_a, (batch, n_sectors, n_sectors), dtype=jnp.float32)
    deltaE = 0.05 * jax.random.normal(k_d, (1, n_sectors, 1), dtype=jnp.float32)

    # --- check the Pallas f-step against the pure-JAX reference ---
    z_test = jax.random.uniform(k_z, (batch, 2 * n_sectors), dtype=jnp.float32)
    A_T = jnp.swapaxes(A, 1, 2)
    at_dE = jnp.einsum("bji,bj->bi", A, jnp.broadcast_to(deltaE[..., 0], (batch, n_sectors)))
    out_kernel = jax.block_until_ready(leontief_step(A, A_T, z_test, at_dE))
    out_ref = leontief_step_ref(A, z_test, at_dE)
    np.testing.assert_allclose(np.asarray(out_kernel), np.asarray(out_ref),
                               rtol=2e-4, atol=1e-5)

    # --- full DEQ forward (Anderson-accelerated fixed point + final f application) ---
    deq = jax.jit(deq_fixed_point_forward)
    z = jax.block_until_ready(deq(A, deltaE))
    assert z.shape == (batch, 2 * n_sectors, 1)
    assert bool(jnp.all(jnp.isfinite(z)))

    print("KERNEL_OK")
</pallas_src>

<mosaic_0001>
module attributes {stable_mosaic.version = 11 : i64} {
  func.func @_leontief_step_kernel(%arg0: i32, %arg1: memref<2x8x8xf32, #tpu.memory_space<vmem>>, %arg2: memref<2x8x8xf32, #tpu.memory_space<vmem>>, %arg3: memref<2x16xf32, #tpu.memory_space<vmem>>, %arg4: memref<2x8xf32, #tpu.memory_space<vmem>>, %arg5: memref<2x16xf32, #tpu.memory_space<vmem>>) attributes {dimension_semantics = [#tpu.dimension_semantics<arbitrary>], iteration_bounds = array<i64: 1>, scalar_prefetch = 0 : i64, scratch_operands = 0 : i64, tpu.core_type = #tpu.core_type<tc>, window_params = [{pipeline_mode = #tpu.pipeline_mode<synchronous>, transform_indices = @transform_0, window_bounds = array<i64: 2, 8, 8>}, {pipeline_mode = #tpu.pipeline_mode<synchronous>, transform_indices = @transform_1, window_bounds = array<i64: 2, 8, 8>}, {pipeline_mode = #tpu.pipeline_mode<synchronous>, transform_indices = @transform_2, window_bounds = array<i64: 2, 16>}, {pipeline_mode = #tpu.pipeline_mode<synchronous>, transform_indices = @transform_3, window_bounds = array<i64: 2, 8>}, {pipeline_mode = #tpu.pipeline_mode<synchronous>, transform_indices = @transform_4, window_bounds = array<i64: 2, 16>}]} {
    %c0 = arith.constant 0 : index
    %c0_0 = arith.constant 0 : index
    %c0_1 = arith.constant 0 : index
    %0 = vector.load %arg1[%c0, %c0_0, %c0_1] : memref<2x8x8xf32, #tpu.memory_space<vmem>>, vector<2x8x8xf32>
    %c0_2 = arith.constant 0 : index
    %c0_3 = arith.constant 0 : index
    %c0_4 = arith.constant 0 : index
    %1 = vector.load %arg2[%c0_2, %c0_3, %c0_4] : memref<2x8x8xf32, #tpu.memory_space<vmem>>, vector<2x8x8xf32>
    %c0_5 = arith.constant 0 : index
    %c0_6 = arith.constant 0 : index
    %2 = vector.load %arg3[%c0_5, %c0_6] : memref<2x16xf32, #tpu.memory_space<vmem>>, vector<2x16xf32>
    %3 = vector.extract_strided_slice %2 {offsets = [0, 0], sizes = [2, 8], strides = [1, 1]} : vector<2x16xf32> to vector<2x8xf32>
    %4 = vector.extract_strided_slice %2 {offsets = [0, 8], sizes = [2, 8], strides = [1, 1]} : vector<2x16xf32> to vector<2x8xf32>
    %cst = arith.constant 4.000000e-01 : f32
    %5 = vector.broadcast %cst : f32 to vector<2x8xf32>
    %6 = arith.divf %4, %5 : vector<2x8xf32>
    %cst_7 = arith.constant 1.000000e+00 : f32
    %7 = vector.broadcast %cst_7 : f32 to vector<2x8xf32>
    %8 = arith.subf %6, %7 : vector<2x8xf32>
    %cst_8 = arith.constant 1.000000e+01 : f32
    %9 = vector.broadcast %cst_8 : f32 to vector<2x8xf32>
    %10 = arith.mulf %9, %8 : vector<2x8xf32>
    %11 = math.exp %10 : vector<2x8xf32>
    %cst_9 = arith.constant 1.000000e+00 : f32
    %12 = vector.broadcast %cst_9 : f32 to vector<2x8xf32>
    %13 = arith.addf %11, %12 : vector<2x8xf32>
    %cst_10 = arith.constant 1.420000e+00 : f32
    %14 = vector.broadcast %cst_10 : f32 to vector<2x8xf32>
    %15 = arith.divf %14, %13 : vector<2x8xf32>
    %16 = vector.shape_cast %3 : vector<2x8xf32> to vector<2x1x8xf32>
    %17 = vector.broadcast %16 : vector<2x1x8xf32> to vector<2x8x8xf32>
    %18 = arith.mulf %0, %17 : vector<2x8x8xf32>
    %cst_11 = arith.constant dense<0.000000e+00> : vector<2x8xf32>
    %19 = vector.multi_reduction <add>, %18, %cst_11 [2] : vector<2x8x8xf32> to vector<2x8xf32>
    %20 = arith.addf %19, %15 : vector<2x8xf32>
    %21 = vector.shape_cast %4 : vector<2x8xf32> to vector<2x1x8xf32>
    %22 = vector.broadcast %21 : vector<2x1x8xf32> to vector<2x8x8xf32>
    %23 = arith.mulf %1, %22 : vector<2x8x8xf32>
    %cst_12 = arith.constant dense<0.000000e+00> : vector<2x8xf32>
    %24 = vector.multi_reduction <add>, %23, %cst_12 [2] : vector<2x8x8xf32> to vector<2x8xf32>
    %c0_13 = arith.constant 0 : index
    %c0_14 = arith.constant 0 : index
    %25 = vector.load %arg4[%c0_13, %c0_14] : memref<2x8xf32, #tpu.memory_space<vmem>>, vector<2x8xf32>
    %26 = arith.addf %24, %25 : vector<2x8xf32>
    %c0_15 = arith.constant 0 : index
    %c0_16 = arith.constant 0 : index
    %27 = vector.load %arg5[%c0_15, %c0_16] : memref<2x16xf32, #tpu.memory_space<vmem>>, vector<2x8xf32>
    tpu.vector_store %arg5[%c0_15, %c0_16], %20 {strides = array<i32>} : memref<2x16xf32, #tpu.memory_space<vmem>>, vector<2x8xf32>,
    %c0_17 = arith.constant 0 : index
    %c8 = arith.constant 8 : index
    %28 = vector.load %arg5[%c0_17, %c8] : memref<2x16xf32, #tpu.memory_space<vmem>>, vector<2x8xf32>
    tpu.vector_store %arg5[%c0_17, %c8], %26 {strides = array<i32>} : memref<2x16xf32, #tpu.memory_space<vmem>>, vector<2x8xf32>,
    return
  }
  func.func @transform_0(%arg0: i32) -> (i32, i32, i32) {
    %c0_i32 = arith.constant 0 : i32
    %c0_i32_0 = arith.constant 0 : i32
    %c0_i32_1 = arith.constant 0 : i32
    %c0_i32_2 = arith.constant 0 : i32
    return %c0_i32, %c0_i32_0, %c0_i32_1 : i32, i32, i32
  }
  func.func @transform_1(%arg0: i32) -> (i32, i32, i32) {
    %c0_i32 = arith.constant 0 : i32
    %c0_i32_0 = arith.constant 0 : i32
    %c0_i32_1 = arith.constant 0 : i32
    %c0_i32_2 = arith.constant 0 : i32
    return %c0_i32, %c0_i32_0, %c0_i32_1 : i32, i32, i32
  }
  func.func @transform_2(%arg0: i32) -> (i32, i32) {
    %c0_i32 = arith.constant 0 : i32
    %c0_i32_0 = arith.constant 0 : i32
    %c0_i32_1 = arith.constant 0 : i32
    return %c0_i32, %c0_i32_0 : i32, i32
  }
  func.func @transform_3(%arg0: i32) -> (i32, i32) {
    %c0_i32 = arith.constant 0 : i32
    %c0_i32_0 = arith.constant 0 : i32
    %c0_i32_1 = arith.constant 0 : i32
    return %c0_i32, %c0_i32_0 : i32, i32
  }
  func.func @transform_4(%arg0: i32) -> (i32, i32) {
    %c0_i32 = arith.constant 0 : i32
    %c0_i32_0 = arith.constant 0 : i32
    %c0_i32_1 = arith.constant 0 : i32
    return %c0_i32, %c0_i32_0 : i32, i32
  }
}

</mosaic_0001>

<llo_original>
// kernel: tpu_custom_call.1
$region0: #{tpu_custom_call.1}
  #allocation0 [shape = 'u32[]', space=smem, size = 0x4, offset = 0x4, fixed_abs, tag = 'smem constant byte address 0x4 - core index']
  #allocation1 [shape = 'u32[144,128]{1,0:T(1,128)}', space=vmem, size = 0x12000, scoped, tag = 'internal scratch']
  %s0 = inlined_call_operand.hbm [shape: f32[2,8,8], index: 0, kind: input, shape index: {}]
  %s1 = inlined_call_operand.hbm [shape: f32[2,8,8], index: 1, kind: input, shape index: {}]
  %s2 = inlined_call_operand.vmem [shape: f32[2,16], index: 2, kind: input, shape index: {}]
  %s3 = inlined_call_operand.vmem [shape: f32[2,8], index: 3, kind: input, shape index: {}]
  %s4 = inlined_call_operand.hbm [shape: f32[2,16], index: 4, kind: output, shape index: {}]
  %s5 = sld [smem:[#allocation0]]
  $region34: #{tpu_custom_call.1} parent=0
    _
  %s7 = ssub.s32 1, %s5
  %s8 = scalar_select 0, %s7, %s5
  $region1: #{tpu_custom_call.1} parent=0
    #allocation2 [shape = 'u8[8192]{0}', space=vmem, size = 0x2000, scoped, tag = 'input window, operand 0, single buffered']
    #allocation3 [shape = 's32[1]{0}', space=sflag, size = 0x4, scoped, tag = 'scoped memory for tpu_custom_call.1']
    #allocation4 [shape = 's32[1]{0}', space=sflag, size = 0x4, scoped, tag = 'scoped memory for tpu_custom_call.1']
    #allocation5 [shape = 'u8[8192]{0}', space=vmem, size = 0x2000, scoped, tag = 'input window, operand 1, single buffered']
    #allocation6 [shape = 's32[1]{0}', space=sflag, size = 0x4, scoped, tag = 'scoped memory for tpu_custom_call.1']
    #allocation7 [shape = 'u8[1024]{0}', space=vmem, size = 0x400, scoped, tag = 'output window, operand 0, single buffered']
    %9 = vsyncpa [#allocation3], 0
    %10 = vsyncpa [#allocation6], 0
    %11 = vsyncpa [#allocation4], 0
    // Predicated region
    $region2: #{tpu_custom_call.1} parent=1 // pred_check
      _
    $region3: #{tpu_custom_call.1} parent=1 // pred_check_branch
      %13 = sbr.rel (0) target = $region5
    $region4: #{tpu_custom_call.1} parent=1 // pred_region
      %s15 = ssub.s32 256, 256
      %16 = vsyncadd [#allocation3], %s15
      %s17 = sshll.u32 [#allocation2], 4
      %s18 = int_to_ptr.vmem [resolvable:$true] %s17
      %23 = dma.hbm_to_vmem [thread:$0]  %s0, 256, %s18, [#allocation3], 128, 128, 8
    $region5: #{tpu_custom_call.1} parent=1 // pred_fallthru
      _
    // Predicated region
    $region6: #{tpu_custom_call.1} parent=1 // pred_check
      _
    $region7: #{tpu_custom_call.1} parent=1 // pred_check_branch
      %25 = sbr.rel (0) target = $region9
    $region8: #{tpu_custom_call.1} parent=1 // pred_region
      %s27 = ssub.s32 256, 256
      %28 = vsyncadd [#allocation6], %s27
      %s29 = sshll.u32 [#allocation5], 4
      %s30 = int_to_ptr.vmem [resolvable:$true] %s29
      %35 = dma.hbm_to_vmem [thread:$0]  %s1, 256, %s30, [#allocation6], 128, 128, 8
    $region9: #{tpu_custom_call.1} parent=1 // pred_fallthru
      _
    // Predicated region
    $region10: #{tpu_custom_call.1} parent=1 // pred_check
      _
    $region11: #{tpu_custom_call.1} parent=1 // pred_check_branch
      %37 = sbr.rel (0) target = $region13
    $region12: #{tpu_custom_call.1} parent=1 // pred_region
      _
    $region13: #{tpu_custom_call.1} parent=1 // pred_fallthru
      _
    // Predicated region
    $region14: #{tpu_custom_call.1} parent=1 // pred_check
      _
    $region15: #{tpu_custom_call.1} parent=1 // pred_check_branch
      %39 = sbr.rel (0) target = $region17
    $region16: #{tpu_custom_call.1} parent=1 // pred_region
      _
    $region17: #{tpu_custom_call.1} parent=1 // pred_fallthru
      _
    // Predicated region
    $region18: #{tpu_custom_call.1} parent=1 // pred_check
      _
    $region19: #{tpu_custom_call.1} parent=1 // pred_check_branch
      %41 = sbr.rel (0) target = $region21
    $region20: #{tpu_custom_call.1} parent=1 // pred_region
      %42 = dma.done [#allocation3], 256
    $region21: #{tpu_custom_call.1} parent=1 // pred_fallthru
      _
    // Predicated region
    $region22: #{tpu_custom_call.1} parent=1 // pred_check
      _
    $region23: #{tpu_custom_call.1} parent=1 // pred_check_branch
      %44 = sbr.rel (0) target = $region25
    $region24: #{tpu_custom_call.1} parent=1 // pred_region
      %45 = dma.done [#allocation6], 256
    $region25: #{tpu_custom_call.1} parent=1 // pred_fallthru
      _
    %v46 = vld [vmem:[#allocation2] sm:$0xff]
    %v47 = vld [vmem:[#allocation2 + $0x8] sm:$0xff]
    %v48 = vld [vmem:[#allocation5] sm:$0xff]
    %v49 = vld [vmem:[#allocation5 + $0x8] sm:$0xff]
    %v50 = vld [vmem:[%s2] sm:$0x3]
    %v51 = vrcp.pop 0.4
    %v52 = vmul.f32 %v50, %v51
    %v53 = vsub.f32 %v52, 1.0
    %v54 = vmul.f32 %v53, 10.0
    %v55 = vmul.f32 %v54, 1.442695
    %v56 = vpow.pop %v55
    %v57 = vadd.f32 %v56, 1.0
    %v58 = vrcp.pop %v57
    %v59 = vmul.f32 1.42, %v58
    %v62 = vunpack.c.l.s4 1966171168
    %v63 = vunpack.c.0.s8 %v62
    %v64 = vlaneseq
    %v65 = vshrl.u32 %v64, 7
    %v66 = vsub.s32 %v63, %v65
    %v67 = vrot.slane %v50, %v66
    %v68 = vcombine.high %v67, %v67
    %v70 = vunpack.c.l.s4 1966171168
    %v71 = vunpack.c.0.s8 %v70
    %v72 = vlaneseq
    %v73 = vshrl.u32 %v72, 7
    %v74 = vsub.s32 %v71, %v73
    %v75 = vrot.slane %v67, %v74
    %v77 = vunpack.c.l.s4 1966171168
    %v78 = vunpack.c.0.s8 %v77
    %v79 = vlaneseq
    %v80 = vshrl.u32 %v79, 7
    %v81 = vsub.s32 %v78, %v80
    %v82 = vrot.slane %v68, %v81
    %v83 = vlaneseq
    %v84 = vshrl.u32 %v83, 7
    %v85 = vsub.s32 0, %v84
    %v86 = vrot.slane %v75, %v85
    %v87 = vlaneseq
    %v88 = vshrl.u32 %v87, 7
    %v89 = vsub.s32 0, %v88
    %v90 = vrot.slane %v82, %v89
    %v93 = vmul.f32 %v46, %v86
    %v94 = vmul.f32 %v47, %v90
    %vm95 = vcmask 64512
    %v96 = vsel %vm95, %v93, 0.0
    %97 = vadd.xlane.f32.xlu0 %v96
    %v98 = vpop.xlane.xlu0 %97
    %v99 = vsel %vm95, %v94, 0.0
    %100 = vadd.xlane.f32.xlu0 %v99
    %v101 = vpop.xlane.xlu0 %100
    %v103 = vlaneseq
    %v104 = vshrl.u32 %v103, 7
    %v105 = vsub.s32 0, %v104
    %v106 = vrot.slane %v59, %v105
    %s108 = sor.u32 256, 8
    %109 = vbcast.lane.b32.xlu0 %v106, %s108
    %v110 = vpop.permute.xlu0 %109
    %v111 = vlaneseq
    %v112 = vshrl.u32 %v111, 7
    %v113 = vsub.s32 1, %v112
    %v114 = vrot.slane %v59, %v113
    %s116 = sor.u32 256, 8
    %117 = vbcast.lane.b32.xlu0 %v114, %s116
    %v118 = vpop.permute.xlu0 %117
    %v121 = vadd.f32 %v98, %v110
    %v122 = vadd.f32 %v101, %v118
    %123 = vrot.lane.b32.xlu0 %v86, 120
    %v124 = vpop.permute.xlu0 %123
    %125 = vrot.lane.b32.xlu0 %v90, 120
    %v126 = vpop.permute.xlu0 %125
    %v129 = vmul.f32 %v48, %v124
    %v130 = vmul.f32 %v49, %v126
    %v131 = vsel %vm95, %v129, 0.0
    %132 = vadd.xlane.f32.xlu0 %v131
    %v133 = vpop.xlane.xlu0 %132
    %v134 = vsel %vm95, %v130, 0.0
    %135 = vadd.xlane.f32.xlu0 %v134
    %v136 = vpop.xlane.xlu0 %135
    %v137 = vld [vmem:[%s3] sm:$0x3]
    %v139 = vlaneseq
    %v140 = vshrl.u32 %v139, 7
    %v141 = vsub.s32 0, %v140
    %v142 = vrot.slane %v137, %v141
    %144 = vbcast.lane.b32.xlu0 %v142, 256
    %v145 = vpop.permute.xlu0 %144
    %v146 = vlaneseq
    %v147 = vshrl.u32 %v146, 7
    %v148 = vsub.s32 1, %v147
    %v149 = vrot.slane %v137, %v148
    %151 = vbcast.lane.b32.xlu0 %v149, 256
    %v152 = vpop.permute.xlu0 %151
    %v155 = vadd.f32 %v133, %v145
    %v156 = vadd.f32 %v136, %v152
    %159 = vset.pattern.permute.xlu0 0
    %160 = vperm.xlu0 %159, %v121
    %v161 = vpop.permute.xlu0 %160
    %162 = vset.pattern.permute.xlu0 0
    %163 = vperm.xlu0 %162, %v122
    %v164 = vpop.permute.xlu0 %163
    %v165 = vlaneseq
    %v166 = vand.u32 %v165, 127
    %v167 = vlaneseq
    %v168 = vshrl.u32 %v167, 7
    %v169 = vsub.s32 %v166, %v168
    %v170 = vrot.slane %v161, %v169
    %v171 = vlaneseq
    %v172 = vshrl.u32 %v171, 7
    %v173 = vsub.s32 %v166, %v172
    %v174 = vrot.slane %v164, %v173
    %vm175 = vcmask 1041409
    %v176 = vsel %vm175, %v174, %v170
    %vm178 = vcmask 58368
    %179 = vst.msk [vmem:[#allocation7] sm:$0x3] %vm178, %v176
    %182 = vset.pattern.permute.xlu0 0
    %183 = vperm.xlu0 %182, %v155
    %v184 = vpop.permute.xlu0 %183
    %185 = vset.pattern.permute.xlu0 0
    %186 = vperm.xlu0 %185, %v156
    %v187 = vpop.permute.xlu0 %186
    %v188 = vadd.s32 %v166, 4294967288
    %v189 = vlaneseq
    %v190 = vshrl.u32 %v189, 7
    %v191 = vsub.s32 %v188, %v190
    %v192 = vrot.slane %v184, %v191
    %v193 = vlaneseq
    %v194 = vshrl.u32 %v193, 7
    %v195 = vsub.s32 %v188, %v194
    %v196 = vrot.slane %v187, %v195
    %v197 = vsel %vm175, %v196, %v192
    %vm199 = vcmask 123968
    %200 = vst.msk [vmem:[#allocation7] sm:$0x3] %vm199, %v197
    // Predicated region
    $region26: #{tpu_custom_call.1} parent=1 // pred_check
      _
    $region27: #{tpu_custom_call.1} parent=1 // pred_check_branch
      %202 = sbr.rel (0) target = $region29
    $region28: #{tpu_custom_call.1} parent=1 // pred_region
      %s204 = ssub.s32 32, 32
      %205 = vsyncadd [#allocation4], %s204
      %s207 = sshll.u32 [#allocation7], 4
      %s208 = int_to_ptr.vmem [resolvable:$true] %s207
      %210 = dma.vmem_to_hbm [thread:$0]  %s208, 32, %s4, [#allocation4]
    $region29: #{tpu_custom_call.1} parent=1 // pred_fallthru
      _
    // Predicated region
    $region30: #{tpu_custom_call.1} parent=1 // pred_check
      _
    $region31: #{tpu_custom_call.1} parent=1 // pred_check_branch
      %212 = sbr.rel (0) target = $region33
    $region32: #{tpu_custom_call.1} parent=1 // pred_region
      %213 = dma.done [#allocation4], 32
    $region33: #{tpu_custom_call.1} parent=1 // pred_fallthru
      _
    %214 = vsyncpa [#allocation3], 1
    %215 = vsyncpa [#allocation6], 1
    %216 = vsyncpa [#allocation4], 1

</llo_original>
